<compile_context>
chip_gen: v7x
topology: tpu7x:2x2x1
jax: 0.10.0
libtpu: 0.0.40
codegen_flags: <defaults>
</compile_context>

<pallas_src>
import jax
import jax.numpy as jnp
from jax.experimental import pallas as pl
from jax.experimental.pallas import tpu as pltpu

HIDDEN_SIZE = 32
NUM_LAYERS = 1
MAX_ITEMS = 8          # per-basket item-index padding length (static)


def encoder_gru_seq_kernel(idx_ref, cnt_ref,                      # SMEM (scalar prefetch)
                           wcomb_ref, whh_ref, bi_ref, bhn_ref,   # VMEM weights/biases
                           h0_ref,                                # VMEM initial hidden
                           out_ref,                               # VMEM output (T, H)
                           h_scratch):                            # VMEM scratch (1, H)
    """GRU over a sequence of baskets; one grid step per basket.

    idx_ref   : (T, MAX_ITEMS) int32  padded item indices per basket (SMEM)
    cnt_ref   : (T,)           int32  number of valid items per basket (SMEM)
    wcomb_ref : (V, 3H)  E @ W_ih^T, gates concatenated on lanes [r|z|n]
    whh_ref   : (H, 3H)  W_hh^T,     gates concatenated on lanes [r|z|n]
    bi_ref    : (1, 3H)  [b_ir+b_hr | b_iz+b_hz | b_in]
    bhn_ref   : (1, H)   b_hn
    h0_ref    : (1, H)   initial hidden state
    out_ref   : (T, H)   per-step hidden states (row t written at step t)
    h_scratch : (1, H)   hidden state carried across grid steps
    """
    H = HIDDEN_SIZE
    t = pl.program_id(0)

    @pl.when(t == 0)
    def _():
        h_scratch[...] = h0_ref[...]

    h = h_scratch[...]                                       # (1, H)
    n_items = cnt_ref[t]

    # In-kernel gather-sum (replaces wrapper scatter + (1,V)x(V,3H) matmul):
    #   gi_raw = sum_j wcomb[idx[t, j], :] over valid j.  Padded slots point at
    #   row 0 (always in bounds) and are masked out by the valid-item count.
    def gather_body(j, acc):
        row = wcomb_ref[pl.ds(idx_ref[t, j], 1), :]          # (1, 3H)
        keep = (j < n_items).astype(jnp.float32)
        return acc + keep * row

    gi = jax.lax.fori_loop(0, MAX_ITEMS, gather_body,
                           jnp.zeros((1, 3 * H), jnp.float32), unroll=True)
    gi = gi + bi_ref[...]                                    # (1, 3H)

    # Single recurrent MXU push per step: (1, H) x (H, 3H).
    gh = jnp.dot(h, whh_ref[...], preferred_element_type=jnp.float32)

    # r and z share the add-then-sigmoid form -> one fused VPU/EUP pass.
    rz = jax.nn.sigmoid(gi[:, :2 * H] + gh[:, :2 * H])       # (1, 2H)
    r = rz[:, :H]
    z = rz[:, H:]
    n = jnp.tanh(gi[:, 2 * H:] + r * (gh[:, 2 * H:] + bhn_ref[...]))
    h_new = (1.0 - z) * n + z * h

    h_scratch[...] = h_new
    out_ref[pl.ds(t, 1), :] = h_new


def gru_sequence_pallas(idx_padded, counts, h0, prepped):
    """Run T GRU steps (one per basket) inside a single pallas_call."""
    T = idx_padded.shape[0]
    H = HIDDEN_SIZE
    V = prepped["wcomb"].shape[0]

    grid_spec = pltpu.PrefetchScalarGridSpec(
        num_scalar_prefetch=2,                    # idx_padded, counts -> SMEM
        grid=(T,),                                # recurrence axis
        in_specs=[
            # Constant block index: weights DMA'd once, VMEM-resident all steps.
            pl.BlockSpec((V, 3 * H), lambda t, idx, cnt: (0, 0)),
            pl.BlockSpec((H, 3 * H), lambda t, idx, cnt: (0, 0)),
            pl.BlockSpec((1, 3 * H), lambda t, idx, cnt: (0, 0)),
            pl.BlockSpec((1, H), lambda t, idx, cnt: (0, 0)),
            pl.BlockSpec((1, H), lambda t, idx, cnt: (0, 0)),
        ],
        # Whole-array output block, resident across steps, one HBM writeback.
        out_specs=pl.BlockSpec((T, H), lambda t, idx, cnt: (0, 0)),
        scratch_shapes=[pltpu.VMEM((1, H), jnp.float32)],
    )
    return pl.pallas_call(
        encoder_gru_seq_kernel,
        out_shape=jax.ShapeDtypeStruct((T, H), jnp.float32),
        grid_spec=grid_spec,
        compiler_params=pltpu.CompilerParams(
            dimension_semantics=("arbitrary",)),   # sequential recurrence
        # TODO(synk): when baskets are batched, add a leading "parallel" batch
        # grid axis so v7x's second TensorCore is used.
    )(idx_padded, counts, prepped["wcomb"], prepped["whh_t"],
      prepped["bias_i"], prepped["bias_hn"], h0)


def prepare_params(params):
    """One-time weight preparation (hoisted out of the per-call hot path)."""
    H = HIDDEN_SIZE
    E = params["embedding"]                       # (V, H)
    w_ih, w_hh = params["w_ih"], params["w_hh"]   # (3H, H) each, PyTorch layout
    b_ih, b_hh = params["b_ih"], params["b_hh"]   # (3H,) each

    hi = jax.lax.Precision.HIGHEST
    wcomb = jnp.dot(E, w_ih.T, precision=hi)      # (V, 3H): gather+input matmul fused
    whh_t = jnp.asarray(w_hh.T)                   # (H, 3H)
    bias_i = jnp.concatenate(
        [b_ih[:2 * H] + b_hh[:2 * H], b_ih[2 * H:]]).reshape(1, 3 * H)
    bias_hn = b_hh[2 * H:].reshape(1, H)
    return {"wcomb": wcomb, "whh_t": whh_t, "bias_i": bias_i, "bias_hn": bias_hn}


@jax.jit
def encoder_rnn_new_forward(item_indices, hidden, prepped):
    """Pallas equivalent of EncoderRNN_new.forward(input, hidden) (one step)."""
    H = HIDDEN_SIZE
    n = item_indices.shape[0]
    idx = jnp.zeros((1, MAX_ITEMS), jnp.int32).at[0, :n].set(
        item_indices.astype(jnp.int32))
    cnt = jnp.array([n], jnp.int32)
    h_new = gru_sequence_pallas(idx, cnt, hidden.reshape(1, H), prepped)   # (1, H)
    # match PyTorch shapes: output (seq=1, batch=1, H), hidden (num_layers, 1, H)
    return h_new.reshape(1, 1, H), h_new.reshape(NUM_LAYERS, 1, H)


@jax.jit
def encoder_rnn_new_encode_sequence(idx_padded, counts, hidden, prepped):
    """T consecutive EncoderRNN_new.forward steps fused into one pallas_call."""
    T = idx_padded.shape[0]
    H = HIDDEN_SIZE
    outs = gru_sequence_pallas(idx_padded, counts, hidden.reshape(1, H), prepped)
    return outs.reshape(T, 1, H), outs[T - 1].reshape(NUM_LAYERS, 1, H)


# ------------------------- pure-JAX reference ------------------------------

def reference_gru_step(x, h, params):
    H = HIDDEN_SIZE
    hi = jax.lax.Precision.HIGHEST
    w_ih, w_hh, b_ih, b_hh = (params["w_ih"], params["w_hh"],
                              params["b_ih"], params["b_hh"])
    gi = jnp.dot(x, w_ih.T, precision=hi) + b_ih
    gh = jnp.dot(h, w_hh.T, precision=hi) + b_hh
    r = jax.nn.sigmoid(gi[:, :H] + gh[:, :H])
    z = jax.nn.sigmoid(gi[:, H:2 * H] + gh[:, H:2 * H])
    n = jnp.tanh(gi[:, 2 * H:] + r * gh[:, 2 * H:])
    return (1.0 - z) * n + z * h


def reference_forward(item_indices, hidden, params):
    """Pure-JAX reference of the original PyTorch math (single step)."""
    H = HIDDEN_SIZE
    x = jnp.sum(params["embedding"][item_indices], axis=0, keepdims=True)   # (1, H)
    h_new = reference_gru_step(x, hidden.reshape(1, H), params)
    return h_new.reshape(1, 1, H), h_new.reshape(NUM_LAYERS, 1, H)


def init_params(key, input_size, hidden_size):
    """Deterministic parameter init with PyTorch-like shapes."""
    k_emb, k_wih, k_whh, k_bih, k_bhh = jax.random.split(key, 5)
    bound = 1.0 / float(hidden_size) ** 0.5
    return {
        "embedding": jax.random.normal(k_emb, (input_size, hidden_size), jnp.float32),
        "w_ih": jax.random.uniform(k_wih, (3 * hidden_size, hidden_size),
                                   jnp.float32, -bound, bound),
        "w_hh": jax.random.uniform(k_whh, (3 * hidden_size, hidden_size),
                                   jnp.float32, -bound, bound),
        "b_ih": jax.random.uniform(k_bih, (3 * hidden_size,), jnp.float32, -bound, bound),
        "b_hh": jax.random.uniform(k_bhh, (3 * hidden_size,), jnp.float32, -bound, bound),
    }


if __name__ == "__main__":
    INPUT_SIZE = 64  # vocabulary / item-id space (small, synthetic)

    key = jax.random.PRNGKey(0)
    k_param, k_hidden = jax.random.split(key)
    params = init_params(k_param, INPUT_SIZE, HIDDEN_SIZE)
    prepped = prepare_params(params)          # one-time weight preparation

    # ---- single step: exact PyTorch forward(input, hidden) semantics ------
    item_indices = jnp.array([3, 7, 7, 12, 1], dtype=jnp.int32)
    hidden = jax.random.normal(k_hidden, (NUM_LAYERS, 1, HIDDEN_SIZE), jnp.float32)

    out, hid = encoder_rnn_new_forward(item_indices, hidden, prepped)
    out = jax.block_until_ready(out)
    hid = jax.block_until_ready(hid)

    ref_out, ref_hid = reference_forward(item_indices, hidden, params)
    assert out.shape == (1, 1, HIDDEN_SIZE)
    assert hid.shape == (NUM_LAYERS, 1, HIDDEN_SIZE)
    assert jnp.allclose(out, ref_out, atol=1e-3, rtol=1e-3)
    assert jnp.allclose(hid, ref_hid, atol=1e-3, rtol=1e-3)

    # ---- sequence of baskets: T forward steps fused into ONE pallas_call --
    baskets = [[3, 7, 7, 12, 1], [0, 5], [63, 2, 2, 44, 9],
               [8], [1, 1, 1, 1, 1, 1, 1, 1], [30, 31]]
    T = len(baskets)
    idx_pad = jnp.zeros((T, MAX_ITEMS), jnp.int32)
    counts = []
    for t, b in enumerate(baskets):
        idx_pad = idx_pad.at[t, :len(b)].set(jnp.array(b, jnp.int32))
        counts.append(len(b))
    counts = jnp.array(counts, jnp.int32)

    seq_out, seq_hid = encoder_rnn_new_encode_sequence(idx_pad, counts, hidden, prepped)
    seq_out = jax.block_until_ready(seq_out)
    seq_hid = jax.block_until_ready(seq_hid)

    h_ref = hidden.reshape(1, HIDDEN_SIZE)
    ref_rows = []
    for b in baskets:
        x = jnp.sum(params["embedding"][jnp.array(b, jnp.int32)], axis=0, keepdims=True)
        h_ref = reference_gru_step(x, h_ref, params)
        ref_rows.append(h_ref)
    ref_seq = jnp.concatenate(ref_rows, axis=0).reshape(T, 1, HIDDEN_SIZE)

    assert seq_out.shape == (T, 1, HIDDEN_SIZE)
    assert jnp.allclose(seq_out, ref_seq, atol=1e-3, rtol=1e-3)
    assert jnp.allclose(seq_hid.reshape(1, HIDDEN_SIZE), h_ref, atol=1e-3, rtol=1e-3)

    # TODO(synk): `vectorized_input` in the PyTorch forward is computed but never
    # used or returned, so it is intentionally not materialized here.
    print("KERNEL_OK")
</pallas_src>

<mosaic_0001>
module attributes {stable_mosaic.version = 11 : i64} {
  func.func @encoder_gru_seq_kernel(%arg0: i32, %arg1: memref<1x8xi32, #tpu.memory_space<smem>>, %arg2: memref<1xi32, #tpu.memory_space<smem>>, %arg3: memref<64x96xf32, #tpu.memory_space<vmem>>, %arg4: memref<32x96xf32, #tpu.memory_space<vmem>>, %arg5: memref<1x96xf32, #tpu.memory_space<vmem>>, %arg6: memref<1x32xf32, #tpu.memory_space<vmem>>, %arg7: memref<1x32xf32, #tpu.memory_space<vmem>>, %arg8: memref<1x32xf32, #tpu.memory_space<vmem>>, %arg9: memref<1x32xf32, #tpu.memory_space<vmem>>) attributes {dimension_semantics = [#tpu.dimension_semantics<arbitrary>], iteration_bounds = array<i64: 1>, scalar_prefetch = 2 : i64, scratch_operands = 1 : i64, tpu.core_type = #tpu.core_type<tc>, window_params = [{pipeline_mode = #tpu.pipeline_mode<synchronous>, transform_indices = @transform_0, window_bounds = array<i64: 64, 96>}, {pipeline_mode = #tpu.pipeline_mode<synchronous>, transform_indices = @transform_1, window_bounds = array<i64: 32, 96>}, {pipeline_mode = #tpu.pipeline_mode<synchronous>, transform_indices = @transform_2, window_bounds = array<i64: 1, 96>}, {pipeline_mode = #tpu.pipeline_mode<synchronous>, transform_indices = @transform_3, window_bounds = array<i64: 1, 32>}, {pipeline_mode = #tpu.pipeline_mode<synchronous>, transform_indices = @transform_4, window_bounds = array<i64: 1, 32>}, {pipeline_mode = #tpu.pipeline_mode<synchronous>, transform_indices = @transform_5, window_bounds = array<i64: 1, 32>}]} {
    %c0_i32 = arith.constant 0 : i32
    %0 = arith.cmpi eq, %arg0, %c0_i32 : i32
    %1 = arith.extui %0 : i1 to i32
    %c0_i32_0 = arith.constant 0 : i32
    %2 = arith.cmpi ne, %1, %c0_i32_0 : i32
    scf.if %2 {
      %c0_23 = arith.constant 0 : index
      %c0_24 = arith.constant 0 : index
      %124 = vector.load %arg7[%c0_23, %c0_24] : memref<1x32xf32, #tpu.memory_space<vmem>>, vector<1x32xf32>
      %c0_25 = arith.constant 0 : index
      %c0_26 = arith.constant 0 : index
      %125 = vector.load %arg9[%c0_25, %c0_26] : memref<1x32xf32, #tpu.memory_space<vmem>>, vector<1x32xf32>
      tpu.vector_store %arg9[%c0_25, %c0_26], %124 {strides = array<i32>} : memref<1x32xf32, #tpu.memory_space<vmem>>, vector<1x32xf32>,
    } else {
    }
    %c0 = arith.constant 0 : index
    %c0_1 = arith.constant 0 : index
    %3 = vector.load %arg9[%c0, %c0_1] : memref<1x32xf32, #tpu.memory_space<vmem>>, vector<1x32xf32>
    %4 = arith.index_cast %arg0 : i32 to index
    %5 = memref.load %arg2[%4] : memref<1xi32, #tpu.memory_space<smem>>
    %cst = arith.constant 0.000000e+00 : f32
    %6 = vector.broadcast %cst : f32 to vector<1x96xf32>
    %c0_i32_2 = arith.constant 0 : i32
    %7 = arith.index_cast %arg0 : i32 to index
    %8 = arith.index_cast %c0_i32_2 : i32 to index
    %9 = memref.load %arg1[%7, %8] : memref<1x8xi32, #tpu.memory_space<smem>>
    %10 = arith.index_cast %9 : i32 to index
    %c0_3 = arith.constant 0 : index
    %11 = vector.load %arg3[%10, %c0_3] : memref<64x96xf32, #tpu.memory_space<vmem>>, vector<1x96xf32>
    %12 = arith.cmpi slt, %c0_i32_2, %5 : i32
    %13 = arith.extui %12 : i1 to i32
    %14 = arith.sitofp %13 : i32 to f32
    %15 = vector.broadcast %14 : f32 to vector<1x96xf32>
    %16 = arith.mulf %15, %11 : vector<1x96xf32>
    %17 = arith.addf %6, %16 : vector<1x96xf32>
    %c1_i32 = arith.constant 1 : i32
    %18 = arith.index_cast %arg0 : i32 to index
    %19 = arith.index_cast %c1_i32 : i32 to index
    %20 = memref.load %arg1[%18, %19] : memref<1x8xi32, #tpu.memory_space<smem>>
    %21 = arith.index_cast %20 : i32 to index
    %c0_4 = arith.constant 0 : index
    %22 = vector.load %arg3[%21, %c0_4] : memref<64x96xf32, #tpu.memory_space<vmem>>, vector<1x96xf32>
    %23 = arith.cmpi slt, %c1_i32, %5 : i32
    %24 = arith.extui %23 : i1 to i32
    %25 = arith.sitofp %24 : i32 to f32
    %26 = vector.broadcast %25 : f32 to vector<1x96xf32>
    %27 = arith.mulf %26, %22 : vector<1x96xf32>
    %28 = arith.addf %17, %27 : vector<1x96xf32>
    %c2_i32 = arith.constant 2 : i32
    %29 = arith.index_cast %arg0 : i32 to index
    %30 = arith.index_cast %c2_i32 : i32 to index
    %31 = memref.load %arg1[%29, %30] : memref<1x8xi32, #tpu.memory_space<smem>>
    %32 = arith.index_cast %31 : i32 to index
    %c0_5 = arith.constant 0 : index
    %33 = vector.load %arg3[%32, %c0_5] : memref<64x96xf32, #tpu.memory_space<vmem>>, vector<1x96xf32>
    %34 = arith.cmpi slt, %c2_i32, %5 : i32
    %35 = arith.extui %34 : i1 to i32
    %36 = arith.sitofp %35 : i32 to f32
    %37 = vector.broadcast %36 : f32 to vector<1x96xf32>
    %38 = arith.mulf %37, %33 : vector<1x96xf32>
    %39 = arith.addf %28, %38 : vector<1x96xf32>
    %c3_i32 = arith.constant 3 : i32
    %40 = arith.index_cast %arg0 : i32 to index
    %41 = arith.index_cast %c3_i32 : i32 to index
    %42 = memref.load %arg1[%40, %41] : memref<1x8xi32, #tpu.memory_space<smem>>
    %43 = arith.index_cast %42 : i32 to index
    %c0_6 = arith.constant 0 : index
    %44 = vector.load %arg3[%43, %c0_6] : memref<64x96xf32, #tpu.memory_space<vmem>>, vector<1x96xf32>
    %45 = arith.cmpi slt, %c3_i32, %5 : i32
    %46 = arith.extui %45 : i1 to i32
    %47 = arith.sitofp %46 : i32 to f32
    %48 = vector.broadcast %47 : f32 to vector<1x96xf32>
    %49 = arith.mulf %48, %44 : vector<1x96xf32>
    %50 = arith.addf %39, %49 : vector<1x96xf32>
    %c4_i32 = arith.constant 4 : i32
    %51 = arith.index_cast %arg0 : i32 to index
    %52 = arith.index_cast %c4_i32 : i32 to index
    %53 = memref.load %arg1[%51, %52] : memref<1x8xi32, #tpu.memory_space<smem>>
    %54 = arith.index_cast %53 : i32 to index
    %c0_7 = arith.constant 0 : index
    %55 = vector.load %arg3[%54, %c0_7] : memref<64x96xf32, #tpu.memory_space<vmem>>, vector<1x96xf32>
    %56 = arith.cmpi slt, %c4_i32, %5 : i32
    %57 = arith.extui %56 : i1 to i32
    %58 = arith.sitofp %57 : i32 to f32
    %59 = vector.broadcast %58 : f32 to vector<1x96xf32>
    %60 = arith.mulf %59, %55 : vector<1x96xf32>
    %61 = arith.addf %50, %60 : vector<1x96xf32>
    %c5_i32 = arith.constant 5 : i32
    %62 = arith.index_cast %arg0 : i32 to index
    %63 = arith.index_cast %c5_i32 : i32 to index
    %64 = memref.load %arg1[%62, %63] : memref<1x8xi32, #tpu.memory_space<smem>>
    %65 = arith.index_cast %64 : i32 to index
    %c0_8 = arith.constant 0 : index
    %66 = vector.load %arg3[%65, %c0_8] : memref<64x96xf32, #tpu.memory_space<vmem>>, vector<1x96xf32>
    %67 = arith.cmpi slt, %c5_i32, %5 : i32
    %68 = arith.extui %67 : i1 to i32
    %69 = arith.sitofp %68 : i32 to f32
    %70 = vector.broadcast %69 : f32 to vector<1x96xf32>
    %71 = arith.mulf %70, %66 : vector<1x96xf32>
    %72 = arith.addf %61, %71 : vector<1x96xf32>
    %c6_i32 = arith.constant 6 : i32
    %73 = arith.index_cast %arg0 : i32 to index
    %74 = arith.index_cast %c6_i32 : i32 to index
    %75 = memref.load %arg1[%73, %74] : memref<1x8xi32, #tpu.memory_space<smem>>
    %76 = arith.index_cast %75 : i32 to index
    %c0_9 = arith.constant 0 : index
    %77 = vector.load %arg3[%76, %c0_9] : memref<64x96xf32, #tpu.memory_space<vmem>>, vector<1x96xf32>
    %78 = arith.cmpi slt, %c6_i32, %5 : i32
    %79 = arith.extui %78 : i1 to i32
    %80 = arith.sitofp %79 : i32 to f32
    %81 = vector.broadcast %80 : f32 to vector<1x96xf32>
    %82 = arith.mulf %81, %77 : vector<1x96xf32>
    %83 = arith.addf %72, %82 : vector<1x96xf32>
    %c7_i32 = arith.constant 7 : i32
    %84 = arith.index_cast %arg0 : i32 to index
    %85 = arith.index_cast %c7_i32 : i32 to index
    %86 = memref.load %arg1[%84, %85] : memref<1x8xi32, #tpu.memory_space<smem>>
    %87 = arith.index_cast %86 : i32 to index
    %c0_10 = arith.constant 0 : index
    %88 = vector.load %arg3[%87, %c0_10] : memref<64x96xf32, #tpu.memory_space<vmem>>, vector<1x96xf32>
    %89 = arith.cmpi slt, %c7_i32, %5 : i32
    %90 = arith.extui %89 : i1 to i32
    %91 = arith.sitofp %90 : i32 to f32
    %92 = vector.broadcast %91 : f32 to vector<1x96xf32>
    %93 = arith.mulf %92, %88 : vector<1x96xf32>
    %94 = arith.addf %83, %93 : vector<1x96xf32>
    %c8_i32 = arith.constant 8 : i32
    %c0_11 = arith.constant 0 : index
    %c0_12 = arith.constant 0 : index
    %95 = vector.load %arg5[%c0_11, %c0_12] : memref<1x96xf32, #tpu.memory_space<vmem>>, vector<1x96xf32>
    %96 = arith.addf %94, %95 : vector<1x96xf32>
    %c0_13 = arith.constant 0 : index
    %c0_14 = arith.constant 0 : index
    %97 = vector.load %arg4[%c0_13, %c0_14] : memref<32x96xf32, #tpu.memory_space<vmem>>, vector<32x96xf32>
    %cst_15 = arith.constant dense<0.000000e+00> : vector<1x96xf32>
    %98 = tpu.matmul %3, %97, %cst_15 {dimension_numbers = #tpu.dot_dimension_numbers<[1], [0], [0], [1], [0, 0, 1, 1], [], []>} : vector<1x32xf32>, vector<32x96xf32>, vector<1x96xf32> -> vector<1x96xf32>
    %99 = vector.extract_strided_slice %96 {offsets = [0, 0], sizes = [1, 64], strides = [1, 1]} : vector<1x96xf32> to vector<1x64xf32>
    %100 = vector.extract_strided_slice %98 {offsets = [0, 0], sizes = [1, 64], strides = [1, 1]} : vector<1x96xf32> to vector<1x64xf32>
    %101 = arith.addf %99, %100 : vector<1x64xf32>
    %102 = arith.negf %101 : vector<1x64xf32>
    %103 = math.exp %102 : vector<1x64xf32>
    %cst_16 = arith.constant 1.000000e+00 : f32
    %104 = vector.broadcast %cst_16 : f32 to vector<1x64xf32>
    %105 = arith.addf %104, %103 : vector<1x64xf32>
    %106 = arith.divf %104, %105 : vector<1x64xf32>
    %107 = vector.extract_strided_slice %106 {offsets = [0, 0], sizes = [1, 32], strides = [1, 1]} : vector<1x64xf32> to vector<1x32xf32>
    %108 = vector.extract_strided_slice %106 {offsets = [0, 32], sizes = [1, 32], strides = [1, 1]} : vector<1x64xf32> to vector<1x32xf32>
    %109 = vector.extract_strided_slice %96 {offsets = [0, 64], sizes = [1, 32], strides = [1, 1]} : vector<1x96xf32> to vector<1x32xf32>
    %110 = vector.extract_strided_slice %98 {offsets = [0, 64], sizes = [1, 32], strides = [1, 1]} : vector<1x96xf32> to vector<1x32xf32>
    %c0_17 = arith.constant 0 : index
    %c0_18 = arith.constant 0 : index
    %111 = vector.load %arg6[%c0_17, %c0_18] : memref<1x32xf32, #tpu.memory_space<vmem>>, vector<1x32xf32>
    %112 = arith.addf %110, %111 : vector<1x32xf32>
    %113 = arith.mulf %107, %112 : vector<1x32xf32>
    %114 = arith.addf %109, %113 : vector<1x32xf32>
    %115 = math.tanh %114 : vector<1x32xf32>
    %cst_19 = arith.constant 1.000000e+00 : f32
    %116 = vector.broadcast %cst_19 : f32 to vector<1x32xf32>
    %117 = arith.subf %116, %108 : vector<1x32xf32>
    %118 = arith.mulf %117, %115 : vector<1x32xf32>
    %119 = arith.mulf %108, %3 : vector<1x32xf32>
    %120 = arith.addf %118, %119 : vector<1x32xf32>
    %c0_20 = arith.constant 0 : index
    %c0_21 = arith.constant 0 : index
    %121 = vector.load %arg9[%c0_20, %c0_21] : memref<1x32xf32, #tpu.memory_space<vmem>>, vector<1x32xf32>
    tpu.vector_store %arg9[%c0_20, %c0_21], %120 {strides = array<i32>} : memref<1x32xf32, #tpu.memory_space<vmem>>, vector<1x32xf32>,
    %122 = arith.index_cast %arg0 : i32 to index
    %c0_22 = arith.constant 0 : index
    %123 = vector.load %arg8[%122, %c0_22] : memref<1x32xf32, #tpu.memory_space<vmem>>, vector<1x32xf32>
    tpu.vector_store %arg8[%122, %c0_22], %120 {strides = array<i32>} : memref<1x32xf32, #tpu.memory_space<vmem>>, vector<1x32xf32>,
    return
  }
  func.func @transform_0(%arg0: i32, %arg1: memref<1x8xi32, #tpu.memory_space<smem>>, %arg2: memref<1xi32, #tpu.memory_space<smem>>) -> (i32, i32) {
    %c0_i32 = arith.constant 0 : i32
    %c0_i32_0 = arith.constant 0 : i32
    %c0_i32_1 = arith.constant 0 : i32
    return %c0_i32, %c0_i32_0 : i32, i32
  }
  func.func @transform_1(%arg0: i32, %arg1: memref<1x8xi32, #tpu.memory_space<smem>>, %arg2: memref<1xi32, #tpu.memory_space<smem>>) -> (i32, i32) {
    %c0_i32 = arith.constant 0 : i32
    %c0_i32_0 = arith.constant 0 : i32
    %c0_i32_1 = arith.constant 0 : i32
    return %c0_i32, %c0_i32_0 : i32, i32
  }
  func.func @transform_2(%arg0: i32, %arg1: memref<1x8xi32, #tpu.memory_space<smem>>, %arg2: memref<1xi32, #tpu.memory_space<smem>>) -> (i32, i32) {
    %c0_i32 = arith.constant 0 : i32
    %c0_i32_0 = arith.constant 0 : i32
    %c0_i32_1 = arith.constant 0 : i32
    return %c0_i32, %c0_i32_0 : i32, i32
  }
  func.func @transform_3(%arg0: i32, %arg1: memref<1x8xi32, #tpu.memory_space<smem>>, %arg2: memref<1xi32, #tpu.memory_space<smem>>) -> (i32, i32) {
    %c0_i32 = arith.constant 0 : i32
    %c0_i32_0 = arith.constant 0 : i32
    %c0_i32_1 = arith.constant 0 : i32
    return %c0_i32, %c0_i32_0 : i32, i32
  }
  func.func @transform_4(%arg0: i32, %arg1: memref<1x8xi32, #tpu.memory_space<smem>>, %arg2: memref<1xi32, #tpu.memory_space<smem>>) -> (i32, i32) {
    %c0_i32 = arith.constant 0 : i32
    %c0_i32_0 = arith.constant 0 : i32
    %c0_i32_1 = arith.constant 0 : i32
    return %c0_i32, %c0_i32_0 : i32, i32
  }
  func.func @transform_5(%arg0: i32, %arg1: memref<1x8xi32, #tpu.memory_space<smem>>, %arg2: memref<1xi32, #tpu.memory_space<smem>>) -> (i32, i32) {
    %c0_i32 = arith.constant 0 : i32
    %c0_i32_0 = arith.constant 0 : i32
    %c0_i32_1 = arith.constant 0 : i32
    return %c0_i32, %c0_i32_0 : i32, i32
  }
}

</mosaic_0001>

<llo_original>
// kernel: encoder_rnn_new_forward.1
$region0: #{encoder_rnn_new_forward.1}
  #allocation0 [shape = 'u32[]', space=smem, size = 0x4, offset = 0x4, fixed_abs, tag = 'smem constant byte address 0x4 - core index']
  #allocation1 [shape = 'u32[144,128]{1,0:T(1,128)}', space=vmem, size = 0x12000, scoped, tag = 'internal scratch']
  #allocation2 [shape = 'f32[1,32]{1,0:T(1,128)}', space=vmem, size = 0x200, scoped, tag = 'scratch operand']
  #allocation3 [shape = 's32[1]{0}', space=sflag, size = 0x4, scoped, tag = 'scoped memory for encoder_rnn_new_forward.1']
  #allocation4 [shape = 'u8[512]{0}', space=smem, size = 0x200, scoped, tag = 'prefetched SMEM operand 0']
  #allocation5 [shape = 's32[1]{0:T(128)S(6)}', space=smem, size = 0x200, scoped, tag = 'prefetched SMEM operand 1']
  %s0 = inlined_call_operand.vmem [shape: s32[1,8], index: 0, kind: input, shape index: {}]
  %s1 = inlined_call_operand.<no memory space> [shape: s32[1], index: 1, kind: input, shape index: {}]
  %s2 = inlined_call_operand.hbm [shape: f32[64,96], index: 2, kind: input, shape index: {}]
  %s3 = inlined_call_operand.vmem [shape: f32[32,96], index: 3, kind: input, shape index: {}]
  %s4 = inlined_call_operand.vmem [shape: f32[1,96], index: 4, kind: input, shape index: {}]
  %s5 = inlined_call_operand.vmem [shape: f32[1,32], index: 5, kind: input, shape index: {}]
  %s6 = inlined_call_operand.hbm [shape: f32[1,32], index: 6, kind: input, shape index: {}]
  %s7 = inlined_call_operand.vmem [shape: f32[1,32], index: 7, kind: output, shape index: {}]
  %s8 = sld [smem:[#allocation0]]
  $region42: #{encoder_rnn_new_forward.1} parent=0
    _
  %s10 = ssub.s32 1, %s8
  %s11 = scalar_select 0, %s10, %s8
  %s12 = sshll.u32 %s0, 4
  %s13 = int_to_ptr.vmem [resolvable:$true] %s12
  %15 = dma.vmem_to_smem %s13, 16, [#allocation4], [#allocation3]
  %16 = sst [smem:[#allocation5]] %s1
  %17 = dma.done [#allocation3], 16
  %18 = sfence
  $region1: #{encoder_rnn_new_forward.1} parent=0
    #allocation6 [shape = 'u8[32768]{0}', space=vmem, size = 0x8000, scoped, tag = 'input window, operand 2, single buffered']
    #allocation7 [shape = 's32[1]{0}', space=sflag, size = 0x4, scoped, tag = 'scoped memory for encoder_rnn_new_forward.1']
    #allocation8 [shape = 'u8[512]{0}', space=vmem, size = 0x400, scoped, tag = 'input window, operand 6, single buffered']
    #allocation9 [shape = 's32[1]{0}', space=sflag, size = 0x4, scoped, tag = 'scoped memory for encoder_rnn_new_forward.1']
    %19 = vsyncpa [#allocation7], 0
    %20 = vsyncpa [#allocation9], 0
    // Predicated region
    $region2: #{encoder_rnn_new_forward.1} parent=1 // pred_check
      _
    $region3: #{encoder_rnn_new_forward.1} parent=1 // pred_check_branch
      %22 = sbr.rel (0) target = $region5
    $region4: #{encoder_rnn_new_forward.1} parent=1 // pred_region
      %s24 = ssub.s32 1024, 1024
      %25 = vsyncadd [#allocation7], %s24
      %s26 = sshll.u32 [#allocation6], 4
      %s27 = int_to_ptr.vmem [resolvable:$true] %s26
      %32 = dma.hbm_to_vmem [thread:$0]  %s2, 1024, %s27, [#allocation7], 128, 128, 8
    $region5: #{encoder_rnn_new_forward.1} parent=1 // pred_fallthru
      _
    // Predicated region
    $region6: #{encoder_rnn_new_forward.1} parent=1 // pred_check
      _
    $region7: #{encoder_rnn_new_forward.1} parent=1 // pred_check_branch
      %34 = sbr.rel (0) target = $region9
    $region8: #{encoder_rnn_new_forward.1} parent=1 // pred_region
      _
    $region9: #{encoder_rnn_new_forward.1} parent=1 // pred_fallthru
      _
    // Predicated region
    $region10: #{encoder_rnn_new_forward.1} parent=1 // pred_check
      _
    $region11: #{encoder_rnn_new_forward.1} parent=1 // pred_check_branch
      %36 = sbr.rel (0) target = $region13
    $region12: #{encoder_rnn_new_forward.1} parent=1 // pred_region
      _
    $region13: #{encoder_rnn_new_forward.1} parent=1 // pred_fallthru
      _
    // Predicated region
    $region14: #{encoder_rnn_new_forward.1} parent=1 // pred_check
      _
    $region15: #{encoder_rnn_new_forward.1} parent=1 // pred_check_branch
      %38 = sbr.rel (0) target = $region17
    $region16: #{encoder_rnn_new_forward.1} parent=1 // pred_region
      _
    $region17: #{encoder_rnn_new_forward.1} parent=1 // pred_fallthru
      _
    // Predicated region
    $region18: #{encoder_rnn_new_forward.1} parent=1 // pred_check
      _
    $region19: #{encoder_rnn_new_forward.1} parent=1 // pred_check_branch
      %40 = sbr.rel (0) target = $region21
    $region20: #{encoder_rnn_new_forward.1} parent=1 // pred_region
      %s42 = ssub.s32 16, 16
      %43 = vsyncadd [#allocation9], %s42
      %s45 = sshll.u32 [#allocation8], 4
      %s46 = int_to_ptr.vmem [resolvable:$true] %s45
      %48 = dma.hbm_to_vmem [thread:$0]  %s6, 16, %s46, [#allocation9]
    $region21: #{encoder_rnn_new_forward.1} parent=1 // pred_fallthru
      _
    // Predicated region
    $region22: #{encoder_rnn_new_forward.1} parent=1 // pred_check
      _
    $region23: #{encoder_rnn_new_forward.1} parent=1 // pred_check_branch
      %50 = sbr.rel (0) target = $region25
    $region24: #{encoder_rnn_new_forward.1} parent=1 // pred_region
      %51 = dma.done [#allocation7], 1024
    $region25: #{encoder_rnn_new_forward.1} parent=1 // pred_fallthru
      _
    // Predicated region
    $region26: #{encoder_rnn_new_forward.1} parent=1 // pred_check
      _
    $region27: #{encoder_rnn_new_forward.1} parent=1 // pred_check_branch
      %53 = sbr.rel (0) target = $region29
    $region28: #{encoder_rnn_new_forward.1} parent=1 // pred_region
      %54 = dma.done [#allocation9], 16
    $region29: #{encoder_rnn_new_forward.1} parent=1 // pred_fallthru
      _
    %p55 = scmp.eq.s32.totalorder 0, 0
    // Predicated region
    $region30: #{encoder_rnn_new_forward.1} parent=1 // pred_check
      %p56 = pneg %p55
    $region31: #{encoder_rnn_new_forward.1} parent=1 // pred_check_branch
      %58 = sbr.rel (%p56) target = $region33
    $region32: #{encoder_rnn_new_forward.1} parent=1 // pred_region
      %v59 = vld [vmem:[#allocation8] sm:$0x1]
      %vm60 = vcmask 253952
      %61 = vst.msk [vmem:[#allocation2] sm:$0x1] %vm60, %v59
    $region33: #{encoder_rnn_new_forward.1} parent=1 // pred_fallthru
      _
    %v62 = vld [vmem:[#allocation2] sm:$0x1]
    %s63 = sld [smem:[#allocation5]]
    %s64 = smul.u32 0, 128
    %s65 = sld [smem:[#allocation4 + %s64]]
    %s66 = scalar_lea.vmem [#allocation6], %s65
    %v67 = vld [vmem:[%s66] sm:$0x1]
    %p68 = scmp.gt.s32.totalorder %s63, 0
    %s69 = scalar_select %p68, 1, 0
    %s70 = scvt.s32.f32 %s69
    %v71 = vstv %s70
    %v72 = vmul.f32 %v71, %v67
    %v73 = vadd.f32 %v72, 0.0
    %s74 = sadd.s32 %s64, 1
    %s75 = sld [smem:[#allocation4 + %s74]]
    %s76 = scalar_lea.vmem [#allocation6], %s75
    %v77 = vld [vmem:[%s76] sm:$0x1]
    %p78 = scmp.gt.s32.totalorder %s63, 1
    %s79 = scalar_select %p78, 1, 0
    %s80 = scvt.s32.f32 %s79
    %v81 = vstv %s80
    %v82 = vmul.f32 %v81, %v77
    %v83 = vadd.f32 %v73, %v82
    %s84 = sadd.s32 %s64, 2
    %s85 = sld [smem:[#allocation4 + %s84]]
    %s86 = scalar_lea.vmem [#allocation6], %s85
    %v87 = vld [vmem:[%s86] sm:$0x1]
    %p88 = scmp.gt.s32.totalorder %s63, 2
    %s89 = scalar_select %p88, 1, 0
    %s90 = scvt.s32.f32 %s89
    %v91 = vstv %s90
    %v92 = vmul.f32 %v91, %v87
    %v93 = vadd.f32 %v83, %v92
    %s94 = sadd.s32 %s64, 3
    %s95 = sld [smem:[#allocation4 + %s94]]
    %s96 = scalar_lea.vmem [#allocation6], %s95
    %v97 = vld [vmem:[%s96] sm:$0x1]
    %p98 = scmp.gt.s32.totalorder %s63, 3
    %s99 = scalar_select %p98, 1, 0
    %s100 = scvt.s32.f32 %s99
    %v101 = vstv %s100
    %v102 = vmul.f32 %v101, %v97
    %v103 = vadd.f32 %v93, %v102
    %s104 = sadd.s32 %s64, 4
    %s105 = sld [smem:[#allocation4 + %s104]]
    %s106 = scalar_lea.vmem [#allocation6], %s105
    %v107 = vld [vmem:[%s106] sm:$0x1]
    %p108 = scmp.gt.s32.totalorder %s63, 4
    %s109 = scalar_select %p108, 1, 0
    %s110 = scvt.s32.f32 %s109
    %v111 = vstv %s110
    %v112 = vmul.f32 %v111, %v107
    %v113 = vadd.f32 %v103, %v112
    %s114 = sadd.s32 %s64, 5
    %s115 = sld [smem:[#allocation4 + %s114]]
    %s116 = scalar_lea.vmem [#allocation6], %s115
    %v117 = vld [vmem:[%s116] sm:$0x1]
    %p118 = scmp.gt.s32.totalorder %s63, 5
    %s119 = scalar_select %p118, 1, 0
    %s120 = scvt.s32.f32 %s119
    %v121 = vstv %s120
    %v122 = vmul.f32 %v121, %v117
    %v123 = vadd.f32 %v113, %v122
    %s124 = sadd.s32 %s64, 6
    %s125 = sld [smem:[#allocation4 + %s124]]
    %s126 = scalar_lea.vmem [#allocation6], %s125
    %v127 = vld [vmem:[%s126] sm:$0x1]
    %p128 = scmp.gt.s32.totalorder %s63, 6
    %s129 = scalar_select %p128, 1, 0
    %s130 = scvt.s32.f32 %s129
    %v131 = vstv %s130
    %v132 = vmul.f32 %v131, %v127
    %v133 = vadd.f32 %v123, %v132
    %s134 = sadd.s32 %s64, 7
    %s135 = sld [smem:[#allocation4 + %s134]]
    %s136 = scalar_lea.vmem [#allocation6], %s135
    %v137 = vld [vmem:[%s136] sm:$0x1]
    %p138 = scmp.gt.s32.totalorder %s63, 7
    %s139 = scalar_select %p138, 1, 0
    %s140 = scvt.s32.f32 %s139
    %v141 = vstv %s140
    %v142 = vmul.f32 %v141, %v137
    %v143 = vadd.f32 %v133, %v142
    %v144 = vld [vmem:[%s4] sm:$0x1]
    %v145 = vadd.f32 %v143, %v144
    %v146 = vld [vmem:[%s3] sm:$0xff]
    %v147 = vld [vmem:[%s3 + $0x8] sm:$0xff]
    %v148 = vld [vmem:[%s3 + $0x10] sm:$0xff]
    %v149 = vld [vmem:[%s3 + $0x18] sm:$0xff]
    %vm150 = vcmask 261120
    %v152 = vsel %vm150, %v62, 0
    %154 = vmatprep.subr.mxu0 0.0
    %155 = vmatpush1.msra.mxu0 %v146
    %156 = vmatprep.subr.mxu0 0.0
    %157 = vmatpush1.msra.mxu0 %v147
    %158 = vmatprep.subr.mxu0 0.0
    %159 = vmatpush1.msra.mxu0 %v148
    %160 = vmatprep.subr.mxu0 0.0
    %161 = vmatpush1.msra.mxu0 %v149
    %162 = vmatprep.subr.mxu0 0.0
    %163 = vmatpush1.msra.mxu0 0.0
    %164 = vmatprep.subr.mxu0 0.0
    %165 = vmatpush1.msra.mxu0 0.0
    %166 = vmatprep.subr.mxu0 0.0
    %167 = vmatpush1.msra.mxu0 0.0
    %168 = vmatprep.subr.mxu0 0.0
    %169 = vmatpush1.msra.mxu0 0.0
    %170 = vmatprep.subr.mxu0 0.0
    %171 = vmatpush1.msra.mxu0 0.0
    %172 = vmatprep.subr.mxu0 0.0
    %173 = vmatpush1.msra.mxu0 0.0
    %174 = vmatprep.subr.mxu0 0.0
    %175 = vmatpush1.msra.mxu0 0.0
    %176 = vmatprep.subr.mxu0 0.0
    %177 = vmatpush1.msra.mxu0 0.0
    %178 = vmatprep.subr.mxu0 0.0
    %179 = vmatpush1.msra.mxu0 0.0
    %180 = vmatprep.subr.mxu0 0.0
    %181 = vmatpush1.msra.mxu0 0.0
    %182 = vmatprep.subr.mxu0 0.0
    %183 = vmatpush1.msra.mxu0 0.0
    %184 = vmatprep.subr.mxu0 0.0
    %185 = vmatpush1.msra.mxu0 0.0
    %186 = vmatprep.subr.mxu0 0.0
    %187 = vmatpush1.msra.mxu0 0.0
    %188 = vmatprep.subr.mxu0 0.0
    %189 = vmatpush1.msra.mxu0 0.0
    %190 = vmatprep.subr.mxu0 0.0
    %191 = vmatpush1.msra.mxu0 0.0
    %192 = vmatprep.subr.mxu0 0.0
    %193 = vmatpush1.msra.mxu0 0.0
    %194 = vmatprep.subr.mxu0 0.0
    %195 = vmatpush1.msra.mxu0 0.0
    %196 = vmatprep.subr.mxu0 0.0
    %197 = vmatpush1.msra.mxu0 0.0
    %198 = vmatprep.subr.mxu0 0.0
    %199 = vmatpush1.msra.mxu0 0.0
    %200 = vmatprep.subr.mxu0 0.0
    %201 = vmatpush1.msra.mxu0 0.0
    %202 = vmatprep.subr.mxu0 0.0
    %203 = vmatpush1.msra.mxu0 0.0
    %204 = vmatprep.subr.mxu0 0.0
    %205 = vmatpush1.msra.mxu0 0.0
    %206 = vmatprep.subr.mxu0 0.0
    %207 = vmatpush1.msra.mxu0 0.0
    %208 = vmatprep.subr.mxu0 0.0
    %209 = vmatpush1.msra.mxu0 0.0
    %210 = vmatprep.subr.mxu0 0.0
    %211 = vmatpush1.msra.mxu0 0.0
    %212 = vmatprep.subr.mxu0 0.0
    %213 = vmatpush1.msra.mxu0 0.0
    %214 = vmatprep.subr.mxu0 0.0
    %215 = vmatpush1.msra.mxu0 0.0
    %216 = vmatprep.subr.mxu0 0.0
    %217 = vmatpush1.msra.mxu0 0.0
    %218 = vmatprep.mubr.f32.mxu0 0.0
    %219 = vmatmul.mubr.f32.gmra.mrb[0].mxu0 %v152
    %v220 = vpop.f32.mrb[0].mxu0
    %v221 = vadd.f32 0.0, %v220
    %v222 = vpop.f32.mrb[0].mxu0
    %223 = vdwg.mxu0
    %v224 = vadd.f32 %v145, %v221
    %v225 = vxor.u32 %v224, 2147483648
    %v226 = vmul.f32 %v225, 1.442695
    %v227 = vpow.pop %v226
    %v228 = vadd.f32 %v227, 1.0
    %v229 = vrcp.pop %v228
    %v230 = vmul.f32 1.0, %v229
    %v231 = vld [vmem:[%s5] sm:$0x1]
    %v233 = vlaneseq
    %v234 = vshrl.u32 %v233, 7
    %v235 = vsub.s32 0, %v234
    %v236 = vrot.slane %v231, %v235
    %237 = vrot.lane.b32.xlu0 %v236, 64
    %v238 = vpop.permute.xlu0 %237
    %v240 = vadd.f32 %v221, %v238
    %242 = vrot.lane.b32.xlu0 %v240, 64
    %v243 = vpop.permute.xlu0 %242
    %v245 = vmul.f32 %v230, %v243
    %247 = vrot.lane.b32.xlu0 %v245, 64
    %v248 = vpop.permute.xlu0 %247
    %v250 = vadd.f32 %v145, %v248
    %v251 = vtanh.pop %v250
    %v252 = vsub.f32 1.0, %v230
    %254 = vrot.lane.b32.xlu0 %v251, 96
    %v255 = vpop.permute.xlu0 %254
    %v257 = vmul.f32 %v252, %v255
    %v258 = vlaneseq
    %v259 = vshrl.u32 %v258, 7
    %v260 = vsub.s32 0, %v259
    %v261 = vrot.slane %v62, %v260
    %262 = vrot.lane.b32.xlu0 %v261, 32
    %v263 = vpop.permute.xlu0 %262
    %v265 = vmul.f32 %v230, %v263
    %v266 = vadd.f32 %v257, %v265
    %268 = vrot.lane.b32.xlu0 %v266, 96
    %v269 = vpop.permute.xlu0 %268
    %vm271 = vcmask 253952
    %272 = vst.msk [vmem:[#allocation2] sm:$0x1] %vm271, %v269
    %273 = vst.msk [vmem:[%s7] sm:$0x1] %vm271, %v269
    // Predicated region
    $region34: #{encoder_rnn_new_forward.1} parent=1 // pred_check
      _
    $region35: #{encoder_rnn_new_forward.1} parent=1 // pred_check_branch
      %275 = sbr.rel (0) target = $region37
    $region36: #{encoder_rnn_new_forward.1} parent=1 // pred_region
      _
    $region37: #{encoder_rnn_new_forward.1} parent=1 // pred_fallthru
      _
    // Predicated region
    $region38: #{encoder_rnn_new_forward.1} parent=1 // pred_check
      _
    $region39: #{encoder_rnn_new_forward.1} parent=1 // pred_check_branch
      %277 = sbr.rel (0) target = $region41
    $region40: #{encoder_rnn_new_forward.1} parent=1 // pred_region
      _
    $region41: #{encoder_rnn_new_forward.1} parent=1 // pred_fallthru
      _
    %278 = vsyncpa [#allocation7], 1
    %279 = vsyncpa [#allocation9], 1

</llo_original>
